<compile_context>
chip_gen: v5e
topology: v5e:2x2
jax: 0.10.0
libtpu: 0.0.40
codegen_flags: <defaults>
</compile_context>

<pallas_src>
import functools

import jax
import jax.numpy as jnp
from jax import lax
from jax.experimental import pallas as pl
from jax.experimental.pallas import tpu as pltpu


def _to_f32(x):
    return x if x.dtype == jnp.float32 else x.astype(jnp.float32)


# ----------------------------------------------------------------------------
# Single-instance kernel: gridless, whole arrays resident in VMEM.
# ----------------------------------------------------------------------------
def _attention_kernel(kv_ref, w_ref, out_ref):
    # kv_ref : (N, D), w_ref : (D, D), out_ref : (1, D)
    kv = _to_f32(kv_ref[...])
    w = _to_f32(w_ref[...])

    s = jnp.sum(kv, axis=0, keepdims=True)                    # (1, D)
    # G = KV @ W : N (>=8) rows in one MXU push instead of a 1-row W @ s matvec;
    # sim[n] = G[n] . s  ==  KV[n] . (W @ s)  (same math, reassociated).
    g = jnp.dot(kv, w, preferred_element_type=jnp.float32)    # (N, D)
    sim = jnp.sum(g * s, axis=1, keepdims=True)               # (N, 1)
    out = jnp.sum(kv * sim, axis=0, keepdims=True)            # (1, D)
    out_ref[...] = out.astype(out_ref.dtype)


def my_attention_layer(qkv, weights):
    """Pallas implementation of MyAttentionLayer.forward for one (N, D) input."""
    n, d = qkv.shape
    assert weights.shape == (d, d)
    # Whole-array VMEM specs and no grid: everything fits in one tile, so any
    # grid / pipelining would be pure fixed overhead.
    out = pl.pallas_call(
        _attention_kernel,
        out_shape=jax.ShapeDtypeStruct((1, d), qkv.dtype),
        in_specs=[
            pl.BlockSpec(memory_space=pltpu.MemorySpace.VMEM),
            pl.BlockSpec(memory_space=pltpu.MemorySpace.VMEM),
        ],
        out_specs=pl.BlockSpec(memory_space=pltpu.MemorySpace.VMEM),
    )(qkv, weights)
    return out[0]                                              # (D,)


# ----------------------------------------------------------------------------
# Batched kernel: `gb` independent layer instances per grid step.
# ----------------------------------------------------------------------------
def _attention_batched_kernel(kv_ref, w_ref, out_ref, *, gb, n):
    # kv_ref : (gb*n, D)  -- rows [i*n, (i+1)*n) belong to local instance i
    # w_ref  : (D, D)
    # out_ref: (gb, D)
    kv = _to_f32(kv_ref[...])
    w = _to_f32(w_ref[...])
    rows = gb * n

    # Constant 0/1 selector matrices built from 2-D iotas (no integer division).
    # smat[i, r] = 1 iff row r belongs to local instance i          (gb, rows)
    g_row = lax.broadcasted_iota(jnp.int32, (gb, rows), 0)
    r_col = lax.broadcasted_iota(jnp.int32, (gb, rows), 1)
    smat = jnp.where(
        jnp.logical_and(r_col >= g_row * n, r_col < (g_row + 1) * n), 1.0, 0.0)
    # emat[r, i] = 1 iff row r belongs to local instance i          (rows, gb)
    r_row = lax.broadcasted_iota(jnp.int32, (rows, gb), 0)
    g_col = lax.broadcasted_iota(jnp.int32, (rows, gb), 1)
    emat = jnp.where(
        jnp.logical_and(r_row >= g_col * n, r_row < (g_col + 1) * n), 1.0, 0.0)

    # Per-instance sums s_i = sum_n kv_i[n]                        (gb, D)
    s = jnp.dot(smat, kv, preferred_element_type=jnp.float32)
    # Broadcast each instance's s back to its own rows             (rows, D)
    sexp = jnp.dot(emat, s, preferred_element_type=jnp.float32)
    # G = KV @ W : gb*n rows in a single MXU push                  (rows, D)
    g = jnp.dot(kv, w, preferred_element_type=jnp.float32)
    # sim[r] = G[r] . s_{inst(r)}  ==  kv[r] . (W @ s_{inst(r)})   (rows, 1)
    sim = jnp.sum(g * sexp, axis=1, keepdims=True)
    # out[i] = sum_{r in instance i} sim[r] * kv[r]                (gb, D)
    out = jnp.dot(smat, sim * kv, preferred_element_type=jnp.float32)
    out_ref[...] = out.astype(out_ref.dtype)


def my_attention_layer_batched(qkv_batch, weights, *, instances_per_step=8):
    """Apply MyAttentionLayer to a batch of independent (N, D) inputs.

    One pallas_call amortizes launch/DMA overhead over the whole batch; the
    batch grid axis is "parallel" so v7x's two TensorCores split it (no effect
    on single-TC v5e/v6e).
    """
    b, n, d = qkv_batch.shape
    assert weights.shape == (d, d)
    gb = max(1, min(instances_per_step, b))
    while b % gb:
        gb -= 1

    kv_flat = qkv_batch.reshape(b * n, d)   # rows of instance 0, then 1, ...
    kernel = functools.partial(_attention_batched_kernel, gb=gb, n=n)
    return pl.pallas_call(
        kernel,
        out_shape=jax.ShapeDtypeStruct((b, d), qkv_batch.dtype),
        grid=(b // gb,),
        in_specs=[
            pl.BlockSpec((gb * n, d), lambda i: (i, 0)),   # this step's instances
            pl.BlockSpec((d, d), lambda i: (0, 0)),        # shared weights
        ],
        out_specs=pl.BlockSpec((gb, d), lambda i: (i, 0)),
        compiler_params=pltpu.CompilerParams(
            dimension_semantics=("parallel",)),
    )(kv_flat, weights)


# ----------------------------------------------------------------------------
# Plain-JAX reference (mirror of the PyTorch forward) and self-test.
# ----------------------------------------------------------------------------
def _reference(qkv, weights):
    s = jnp.sum(qkv, axis=0)
    q = weights @ s
    sim = qkv @ q
    return jnp.sum(qkv * sim[:, None], axis=0)


def _assert_close(got, want, tol=1e-4):
    scale = float(jnp.maximum(jnp.max(jnp.abs(want)), 1.0))
    err = float(jnp.max(jnp.abs(got - want)))
    assert err <= tol * scale, f"mismatch: max abs err {err} (allowed {tol * scale})"


if __name__ == "__main__":
    QKV_size = 32   # D (feature / hidden size)
    seq = 8         # N (number of vectors per instance)
    batch = 64      # number of independent layer instances for the batched path

    key = jax.random.PRNGKey(0)
    k_w, k_x = jax.random.split(key)
    weights = jax.random.normal(k_w, (QKV_size, QKV_size), dtype=jnp.float32)
    qkv_batch = jax.random.normal(k_x, (batch, seq, QKV_size), dtype=jnp.float32)

    # Single-instance (gridless) path.
    out_single = jax.block_until_ready(my_attention_layer(qkv_batch[0], weights))
    assert out_single.shape == (QKV_size,)
    _assert_close(out_single, _reference(qkv_batch[0], weights))

    # Batched path: one pallas_call for all instances.
    out_batch = jax.block_until_ready(
        my_attention_layer_batched(qkv_batch, weights))
    assert out_batch.shape == (batch, QKV_size)
    ref_batch = jax.vmap(_reference, in_axes=(0, None))(qkv_batch, weights)
    _assert_close(out_batch, ref_batch)

    print("KERNEL_OK")
</pallas_src>

<mosaic_0001>
module attributes {stable_mosaic.version = 11 : i64} {
  func.func @_attention_kernel(%arg0: memref<8x32xf32, #tpu.memory_space<vmem>>, %arg1: memref<32x32xf32, #tpu.memory_space<vmem>>, %arg2: memref<1x32xf32, #tpu.memory_space<vmem>>) attributes {dimension_semantics = [], scalar_prefetch = 0 : i64, scratch_operands = 0 : i64, tpu.core_type = #tpu.core_type<tc>} {
    %c0 = arith.constant 0 : index
    %c0_0 = arith.constant 0 : index
    %0 = vector.load %arg0[%c0, %c0_0] : memref<8x32xf32, #tpu.memory_space<vmem>>, vector<8x32xf32>
    %c0_1 = arith.constant 0 : index
    %c0_2 = arith.constant 0 : index
    %1 = vector.load %arg1[%c0_1, %c0_2] : memref<32x32xf32, #tpu.memory_space<vmem>>, vector<32x32xf32>
    %cst = arith.constant dense<0.000000e+00> : vector<32xf32>
    %2 = vector.multi_reduction <add>, %0, %cst [0] : vector<8x32xf32> to vector<32xf32>
    %3 = vector.shape_cast %2 : vector<32xf32> to vector<1x32xf32>
    %cst_3 = arith.constant dense<0.000000e+00> : vector<8x32xf32>
    %4 = tpu.matmul %0, %1, %cst_3 {dimension_numbers = #tpu.dot_dimension_numbers<[1], [0], [0], [1], [0, 0, 1, 1], [], []>} : vector<8x32xf32>, vector<32x32xf32>, vector<8x32xf32> -> vector<8x32xf32>
    %5 = vector.broadcast %3 : vector<1x32xf32> to vector<8x32xf32>
    %6 = arith.mulf %4, %5 : vector<8x32xf32>
    %cst_4 = arith.constant dense<0.000000e+00> : vector<8xf32>
    %7 = vector.multi_reduction <add>, %6, %cst_4 [1] : vector<8x32xf32> to vector<8xf32>
    %8 = vector.shape_cast %7 : vector<8xf32> to vector<8x1xf32>
    %9 = vector.broadcast %8 : vector<8x1xf32> to vector<8x32xf32>
    %10 = arith.mulf %0, %9 : vector<8x32xf32>
    %cst_5 = arith.constant dense<0.000000e+00> : vector<32xf32>
    %11 = vector.multi_reduction <add>, %10, %cst_5 [0] : vector<8x32xf32> to vector<32xf32>
    %12 = vector.shape_cast %11 : vector<32xf32> to vector<1x32xf32>
    %c0_6 = arith.constant 0 : index
    %c0_7 = arith.constant 0 : index
    %13 = vector.load %arg2[%c0_6, %c0_7] : memref<1x32xf32, #tpu.memory_space<vmem>>, vector<1x32xf32>
    tpu.vector_store %arg2[%c0_6, %c0_7], %12 {strides = array<i32>} : memref<1x32xf32, #tpu.memory_space<vmem>>, vector<1x32xf32>,
    return
  }
}

</mosaic_0001>

<llo_original>
// kernel: tpu_custom_call.1
$region0: #{tpu_custom_call.1}
  #allocation0 [shape = 'u32[]', space=smem, size = 0x4, offset = 0x4, fixed_abs, tag = 'smem constant byte address 0x4 - core index']
  #allocation1 [shape = 'u32[72,128]{1,0:T(1,128)}', space=vmem, size = 0x9000, scoped, tag = 'internal scratch']
  %s0 = inlined_call_operand.hbm [shape: f32[8,32], index: 0, kind: input, shape index: {}]
  %s1 = inlined_call_operand.hbm [shape: f32[32,32], index: 1, kind: input, shape index: {}]
  %s2 = inlined_call_operand.hbm [shape: f32[1,32], index: 2, kind: output, shape index: {}]
  %s3 = sld [smem:[#allocation0]]
  $region26: #{tpu_custom_call.1} parent=0
    _
  %s5 = ssub.s32 1, %s3
  %s6 = scalar_select 0, %s5, %s3
  $region1: #{tpu_custom_call.1} parent=0
    #allocation2 [shape = 'u8[4096]{0}', space=vmem, size = 0x1000, scoped, tag = 'input window, operand 0, single buffered']
    #allocation3 [shape = 's32[1]{0}', space=sflag, size = 0x4, scoped, tag = 'scoped memory for tpu_custom_call.1']
    #allocation4 [shape = 's32[1]{0}', space=sflag, size = 0x4, scoped, tag = 'scoped memory for tpu_custom_call.1']
    #allocation5 [shape = 'u8[16384]{0}', space=vmem, size = 0x4000, scoped, tag = 'input window, operand 1, single buffered']
    #allocation6 [shape = 's32[1]{0}', space=sflag, size = 0x4, scoped, tag = 'scoped memory for tpu_custom_call.1']
    #allocation7 [shape = 'u8[512]{0}', space=vmem, size = 0x400, scoped, tag = 'output window, operand 0, single buffered']
    %7 = vsyncpa [#allocation3], 0
    %8 = vsyncpa [#allocation6], 0
    %9 = vsyncpa [#allocation4], 0
    // Predicated region
    $region2: #{tpu_custom_call.1} parent=1 // pred_check
      _
    $region3: #{tpu_custom_call.1} parent=1 // pred_check_branch
      %11 = sbr.rel (0) target = $region5
    $region4: #{tpu_custom_call.1} parent=1 // pred_region
      %13 = vsyncadd [#allocation3], 0
      %s15 = sshll.u32 %s0, 4
      %s16 = int_to_ptr.hbm [resolvable:$true] %s15
      %s17 = sshll.u32 [#allocation2], 4
      %s18 = int_to_ptr.vmem [resolvable:$true] %s17
      %20 = dma.hbm_to_vmem [thread:$0]  %s16, 128, %s18, [#allocation3]
    $region5: #{tpu_custom_call.1} parent=1 // pred_fallthru
      _
    // Predicated region
    $region6: #{tpu_custom_call.1} parent=1 // pred_check
      _
    $region7: #{tpu_custom_call.1} parent=1 // pred_check_branch
      %22 = sbr.rel (0) target = $region9
    $region8: #{tpu_custom_call.1} parent=1 // pred_region
      %24 = vsyncadd [#allocation6], 0
      %s25 = sshll.u32 %s1, 4
      %s26 = int_to_ptr.hbm [resolvable:$true] %s25
      %s27 = sshll.u32 [#allocation5], 4
      %s28 = int_to_ptr.vmem [resolvable:$true] %s27
      %33 = dma.hbm_to_vmem [thread:$0]  %s26, 512, %s28, [#allocation6], 128, 128, 8
    $region9: #{tpu_custom_call.1} parent=1 // pred_fallthru
      _
    // Predicated region
    $region10: #{tpu_custom_call.1} parent=1 // pred_check
      _
    $region11: #{tpu_custom_call.1} parent=1 // pred_check_branch
      %35 = sbr.rel (0) target = $region13
    $region12: #{tpu_custom_call.1} parent=1 // pred_region
      %37 = dma.done [#allocation3], 128
    $region13: #{tpu_custom_call.1} parent=1 // pred_fallthru
      _
    // Predicated region
    $region14: #{tpu_custom_call.1} parent=1 // pred_check
      _
    $region15: #{tpu_custom_call.1} parent=1 // pred_check_branch
      %39 = sbr.rel (0) target = $region17
    $region16: #{tpu_custom_call.1} parent=1 // pred_region
      %41 = dma.done [#allocation6], 512
    $region17: #{tpu_custom_call.1} parent=1 // pred_fallthru
      _
    %v42 = vld [vmem:[#allocation2] sm:$0xff]
    %v43 = vld [vmem:[#allocation5] sm:$0xff]
    %v44 = vld [vmem:[#allocation5 + $0x8] sm:$0xff]
    %v45 = vld [vmem:[#allocation5 + $0x10] sm:$0xff]
    %v46 = vld [vmem:[#allocation5 + $0x18] sm:$0xff]
    %vm47 = vcmask 261120
    %v48 = vsel %vm47, %v42, 0.0
    %v49 = vrot.slane %v48, 4
    %v50 = vadd.f32 %v48, %v49
    %v51 = vrot.slane %v50, 2
    %v52 = vadd.f32 %v50, %v51
    %v53 = vrot.slane %v52, 1
    %v54 = vadd.f32 %v52, %v53
    %v56 = vsel %vm47, %v42, 0
    %58 = vmatpush.msra.mxu0 0.0
    %59 = vmatpush.msra.mxu0 0.0
    %60 = vmatpush.msra.mxu0 0.0
    %61 = vmatpush.msra.mxu0 0.0
    %62 = vmatpush.msra.mxu0 0.0
    %63 = vmatpush.msra.mxu0 0.0
    %64 = vmatpush.msra.mxu0 0.0
    %65 = vmatpush.msra.mxu0 0.0
    %66 = vmatpush.msra.mxu0 0.0
    %67 = vmatpush.msra.mxu0 0.0
    %68 = vmatpush.msra.mxu0 0.0
    %69 = vmatpush.msra.mxu0 0.0
    %70 = vmatpush.msra.mxu0 %v46
    %71 = vmatpush.msra.mxu0 %v45
    %72 = vmatpush.msra.mxu0 %v44
    %73 = vmatpush.msra.mxu0 %v43
    %74 = vmatmul.f32.gmra.mxu0 %v56
    %v75 = vpop.f32.mrf.mxu0
    %v76 = vadd.f32 0.0, %v75
    %77 = vdwg.mxu0
    %v78 = vmul.f32 %v76, %v54
    %v79 = vsel %vm47, %v78, 0.0
    %80 = vadd.xlane.f32.xlu0 %v79
    %v81 = vpop.xlane.xlu0 %80
    %v82 = vmul.f32 %v42, %v81
    %v83 = vsel %vm47, %v82, 0.0
    %v84 = vrot.slane %v83, 4
    %v85 = vadd.f32 %v83, %v84
    %v86 = vrot.slane %v85, 2
    %v87 = vadd.f32 %v85, %v86
    %v88 = vrot.slane %v87, 1
    %v89 = vadd.f32 %v87, %v88
    %vm90 = vcmask 253952
    %91 = vst.msk [vmem:[#allocation7] sm:$0x1] %vm90, %v89
    // Predicated region
    $region18: #{tpu_custom_call.1} parent=1 // pred_check
      _
    $region19: #{tpu_custom_call.1} parent=1 // pred_check_branch
      %93 = sbr.rel (0) target = $region21
    $region20: #{tpu_custom_call.1} parent=1 // pred_region
      %95 = vsyncadd [#allocation4], 0
      %s97 = sshll.u32 [#allocation7], 4
      %s98 = int_to_ptr.vmem [resolvable:$true] %s97
      %s99 = sshll.u32 %s2, 4
      %s100 = int_to_ptr.hbm [resolvable:$true] %s99
      %102 = dma.vmem_to_hbm [thread:$0]  %s98, 16, %s100, [#allocation4]
    $region21: #{tpu_custom_call.1} parent=1 // pred_fallthru
      _
    // Predicated region
    $region22: #{tpu_custom_call.1} parent=1 // pred_check
      _
    $region23: #{tpu_custom_call.1} parent=1 // pred_check_branch
      %104 = sbr.rel (0) target = $region25
    $region24: #{tpu_custom_call.1} parent=1 // pred_region
      %106 = dma.done [#allocation4], 16
    $region25: #{tpu_custom_call.1} parent=1 // pred_fallthru
      _
    %107 = vsyncpa [#allocation3], 1
    %108 = vsyncpa [#allocation6], 1
    %109 = vsyncpa [#allocation4], 1

</llo_original>
